<compile_context>
chip_gen: v7x
topology: tpu7x:2x2x1
jax: 0.10.0
libtpu: 0.0.40
codegen_flags: <defaults>
</compile_context>

<pallas_src>
import functools

import jax
import jax.numpy as jnp
from jax.experimental import pallas as pl
from jax.experimental.pallas import tpu as pltpu


LANES = 128
ACC_SUBLANES = 8          # (8, 128) f32 resident accumulator tile


def _cdiv(a, b):
    return (a + b - 1) // b


def _round_up(a, b):
    return _cdiv(a, b) * b


def _round_down(a, b):
    return (a // b) * b


def _tensorcores_per_device():
    """2 on dual-TensorCore chips (v4/v5p megacore, v7x); 1 on v5e/v6e."""
    try:
        kind = jax.devices()[0].device_kind.lower()
    except Exception:
        return 1
    if "lite" in kind or "v5e" in kind or "v6" in kind:
        return 1
    if "v2" in kind or "v3" in kind:
        return 1
    if "v4" in kind or "v5p" in kind or "v5" in kind or "7" in kind:
        return 2
    return 1


def _mse_xla(x, t):
    d = x.astype(jnp.float32) - t.astype(jnp.float32)
    return jnp.mean(d * d)


def _mse_sum_kernel(x_ref, t_ref, acc_ref, *, rows_valid, block_rows,
                    inner_steps, need_mask):
    """Accumulate sum((x - t)^2) of one (block_rows, 128) tile into a resident
    (1, 8, 128) f32 accumulator (one per core along the 'parallel' axis)."""
    j = pl.program_id(1)

    @pl.when(j == 0)
    def _():
        acc_ref[...] = jnp.zeros_like(acc_ref)

    d = x_ref[...].astype(jnp.float32) - t_ref[...].astype(jnp.float32)
    sq = d * d                                          # (block_rows, 128)

    def fold(v):
        # Fold the block into the (8, 128) accumulator with vreg-wide VPU
        # adds; the single expensive cross-lane reduce happens in the wrapper.
        return v.reshape(1, -1, ACC_SUBLANES, LANES).sum(axis=1)

    if not need_mask:
        # Statically aligned grid: never any clipped block -> no masking.
        acc_ref[...] += fold(sq)
    else:
        c = pl.program_id(0)
        row0 = (c * inner_steps + j) * block_rows       # global first row
        last_row = row0 + block_rows

        @pl.when(last_row <= rows_valid)                # interior fast path
        def _():
            acc_ref[...] += fold(sq)

        @pl.when(last_row > rows_valid)                 # clipped edge block
        def _():
            # Rows >= rows_valid hold stale/undefined VMEM data.  Select
            # (not multiply) after the square so NaN/Inf garbage cannot leak
            # into the accumulator.
            local_row = jax.lax.broadcasted_iota(jnp.int32, sq.shape, 0)
            valid = (row0 + local_row) < rows_valid
            acc_ref[...] += fold(jnp.where(valid, sq, jnp.zeros_like(sq)))


def content_loss(x, target, *, ncores=None, min_pallas_elems=512 * 1024,
                 tile_bytes=None):
    """Pallas ContentLoss.forward: returns (input_passthrough, mse_loss)."""
    assert x.shape == target.shape, "input/target shapes must match"
    total = int(x.size)
    dtype = jnp.dtype(x.dtype)
    itemsize = dtype.itemsize

    # --- tiny inputs: a fused XLA reduction beats pallas_call launch cost ---
    if total < max(1, min_pallas_elems):
        return x, _mse_xla(x, target)

    # --- lane-dense (rows, 128) view of the flattened inputs ---------------
    x_f = x.reshape(-1)
    t_f = target.reshape(-1)
    if total % LANES != 0:
        # TODO(synk): lane-ragged totals still take one minimal pad (a copy)
        # to reach a multiple of 128; a manual-DMA'd flat tail would avoid it,
        # but conv feature maps are virtually always 128-aligned.
        pad = LANES - total % LANES
        x_f = jnp.pad(x_f, (0, pad))    # identical zero padding on both sides
        t_f = jnp.pad(t_f, (0, pad))    # -> zero contribution to the sum
    rows = x_f.size // LANES
    x2 = x_f.reshape(rows, LANES)       # free reshape of a contiguous buffer
    t2 = t_f.reshape(rows, LANES)       # (no copy) when total % 128 == 0

    # --- tiling --------------------------------------------------------------
    sub_mult = max(ACC_SUBLANES, 32 // itemsize)   # 8 f32 / 16 bf16 / 32 int8
    if ncores is None:
        ncores = _tensorcores_per_device()
    ncores = max(1, int(ncores))
    if tile_bytes is None:
        tile_bytes = 4 * 1024 * 1024 if ncores > 1 else 2 * 1024 * 1024
    max_block_rows = max(
        sub_mult, _round_down(tile_bytes // (LANES * itemsize), sub_mult))

    candidates = [ncores] if ncores == 1 else [ncores, 1]
    plan = None
    for nc in candidates:
        rows_per_core = _cdiv(rows, nc)
        inner_steps = max(1, _cdiv(rows_per_core, max_block_rows))
        block_rows = _round_up(
            max(_cdiv(rows_per_core, inner_steps), sub_mult), sub_mult)
        # Never allow a block that starts entirely past the array.
        if (nc * inner_steps - 1) * block_rows < rows:
            plan = (nc, inner_steps, block_rows)
            break
    if plan is None:                     # degenerate tiny/empty case
        return x, _mse_xla(x, target)
    nc, inner_steps, block_rows = plan
    covered_rows = nc * inner_steps * block_rows
    need_mask = covered_rows != rows

    kernel = functools.partial(
        _mse_sum_kernel, rows_valid=rows, block_rows=block_rows,
        inner_steps=inner_steps, need_mask=need_mask)

    in_map = lambda c, j: (c * inner_steps + j, 0)

    partials = pl.pallas_call(
        kernel,
        out_shape=jax.ShapeDtypeStruct((nc, ACC_SUBLANES, LANES), jnp.float32),
        grid=(nc, inner_steps),
        in_specs=[
            pl.BlockSpec((block_rows, LANES), in_map),
            pl.BlockSpec((block_rows, LANES), in_map),
        ],
        out_specs=pl.BlockSpec((1, ACC_SUBLANES, LANES), lambda c, j: (c, 0, 0)),
        compiler_params=pltpu.CompilerParams(
            dimension_semantics=("parallel", "arbitrary"),
        ),
        cost_estimate=pl.CostEstimate(
            flops=3 * total,
            transcendentals=0,
            bytes_accessed=2 * rows * LANES * itemsize
                           + nc * ACC_SUBLANES * LANES * 4,
        ),
    )(x2, t2)

    loss = jnp.sum(partials) / jnp.float32(total)
    # Pass-through: return the original array untouched (no extra HBM stream).
    return x, loss


if __name__ == "__main__":
    kx, kt = jax.random.split(jax.random.PRNGKey(0))

    def run_case(shape, dtype, **kw):
        x = jax.random.normal(kx, shape, jnp.float32).astype(dtype)
        t = jax.random.normal(kt, shape, jnp.float32).astype(dtype)
        out, loss = content_loss(x, t, **kw)
        out = jax.block_until_ready(out)
        loss = jax.block_until_ready(loss)
        ref = jnp.mean((x.astype(jnp.float32) - t.astype(jnp.float32)) ** 2)
        assert jnp.allclose(loss, ref, rtol=1e-4, atol=1e-6), (
            shape, dtype, loss, ref)
        assert (out is x) or jnp.array_equal(out, x)
        return loss

    # 1) Typical small ContentLoss feature map (B=2, C=4, H=W=16): XLA fast path.
    run_case((2, 4, 16, 16), jnp.float32)

    # 2) Forced Pallas path; rows (405) not divisible by the block ->
    #    exercises in-kernel edge masking (no wrapper-side padding).
    run_case((2, 9, 45, 64), jnp.float32, min_pallas_elems=0)

    # 3) Same ragged shape in bf16: dtype-aware sublane rounding + masking.
    run_case((2, 9, 45, 64), jnp.bfloat16, min_pallas_elems=0)

    # 4) Lane-ragged total (not a multiple of 128): minimal-pad fallback.
    run_case((3, 5, 17, 19), jnp.float32, min_pallas_elems=0)

    # 5) Larger aligned map (multi-step reduction per core), default settings.
    run_case((4, 16, 72, 128), jnp.float32)

    print("KERNEL_OK")
</pallas_src>

<mosaic_0001>
module attributes {stable_mosaic.version = 11 : i64} {
  func.func @_mse_sum_kernel(%arg0: i32, %arg1: i32, %arg2: memref<408x128xf32, #tpu.memory_space<vmem>>, %arg3: memref<408x128xf32, #tpu.memory_space<vmem>>, %arg4: memref<1x8x128xf32, #tpu.memory_space<vmem>>) attributes {dimension_semantics = [#tpu.dimension_semantics<parallel>, #tpu.dimension_semantics<arbitrary>], iteration_bounds = array<i64: 1, 1>, scalar_prefetch = 0 : i64, scratch_operands = 0 : i64, tpu.core_type = #tpu.core_type<tc>, window_params = [{transform_indices = @transform_0, window_bounds = array<i64: 408, 128>}, {transform_indices = @transform_1, window_bounds = array<i64: 408, 128>}, {transform_indices = @transform_2, window_bounds = array<i64: 1, 8, 128>}]} {
    %c0_i32 = arith.constant 0 : i32
    %0 = arith.cmpi eq, %arg1, %c0_i32 : i32
    %1 = arith.extui %0 : i1 to i32
    %c0_i32_0 = arith.constant 0 : i32
    %2 = arith.cmpi ne, %1, %c0_i32_0 : i32
    scf.if %2 {
      %cst = arith.constant 0.000000e+00 : f32
      %17 = vector.broadcast %cst : f32 to vector<1x8x128xf32>
      %c0_8 = arith.constant 0 : index
      %c0_9 = arith.constant 0 : index
      %c0_10 = arith.constant 0 : index
      %18 = vector.load %arg4[%c0_8, %c0_9, %c0_10] : memref<1x8x128xf32, #tpu.memory_space<vmem>>, vector<1x8x128xf32>
      tpu.vector_store %arg4[%c0_8, %c0_9, %c0_10], %17 {strides = array<i32>} : memref<1x8x128xf32, #tpu.memory_space<vmem>>, vector<1x8x128xf32>,
    } else {
    }
    %c0 = arith.constant 0 : index
    %c0_1 = arith.constant 0 : index
    %3 = vector.load %arg2[%c0, %c0_1] : memref<408x128xf32, #tpu.memory_space<vmem>>, vector<408x128xf32>
    %c0_2 = arith.constant 0 : index
    %c0_3 = arith.constant 0 : index
    %4 = vector.load %arg3[%c0_2, %c0_3] : memref<408x128xf32, #tpu.memory_space<vmem>>, vector<408x128xf32>
    %5 = arith.subf %3, %4 : vector<408x128xf32>
    %6 = arith.mulf %5, %5 : vector<408x128xf32>
    %c1_i32 = arith.constant 1 : i32
    %7 = arith.muli %arg0, %c1_i32 : i32
    %8 = arith.addi %7, %arg1 : i32
    %c408_i32 = arith.constant 408 : i32
    %9 = arith.muli %8, %c408_i32 : i32
    %c408_i32_4 = arith.constant 408 : i32
    %10 = arith.addi %9, %c408_i32_4 : i32
    %c405_i32 = arith.constant 405 : i32
    %11 = arith.cmpi sle, %10, %c405_i32 : i32
    %12 = arith.extui %11 : i1 to i32
    %c0_i32_5 = arith.constant 0 : i32
    %13 = arith.cmpi ne, %12, %c0_i32_5 : i32
    scf.if %13 {
      %c0_8 = arith.constant 0 : index
      %c0_9 = arith.constant 0 : index
      %c0_10 = arith.constant 0 : index
      %17 = vector.load %arg4[%c0_8, %c0_9, %c0_10] : memref<1x8x128xf32, #tpu.memory_space<vmem>>, vector<1x8x128xf32>
      %18 = vector.shape_cast %6 : vector<408x128xf32> to vector<1x51x8x128xf32>
      %cst = arith.constant dense<0.000000e+00> : vector<1x8x128xf32>
      %19 = vector.multi_reduction <add>, %18, %cst [1] : vector<1x51x8x128xf32> to vector<1x8x128xf32>
      %20 = arith.addf %17, %19 : vector<1x8x128xf32>
      %c0_11 = arith.constant 0 : index
      %c0_12 = arith.constant 0 : index
      %c0_13 = arith.constant 0 : index
      %21 = vector.load %arg4[%c0_11, %c0_12, %c0_13] : memref<1x8x128xf32, #tpu.memory_space<vmem>>, vector<1x8x128xf32>
      tpu.vector_store %arg4[%c0_11, %c0_12, %c0_13], %20 {strides = array<i32>} : memref<1x8x128xf32, #tpu.memory_space<vmem>>, vector<1x8x128xf32>,
    } else {
    }
    %c405_i32_6 = arith.constant 405 : i32
    %14 = arith.cmpi sgt, %10, %c405_i32_6 : i32
    %15 = arith.extui %14 : i1 to i32
    %c0_i32_7 = arith.constant 0 : i32
    %16 = arith.cmpi ne, %15, %c0_i32_7 : i32
    scf.if %16 {
      %17 = tpu.iota {dimensions = array<i32: 0>} : vector<408x128xi32>
      %18 = vector.broadcast %9 : i32 to vector<408x128xi32>
      %19 = arith.addi %18, %17 : vector<408x128xi32>
      %c405_i32_8 = arith.constant 405 : i32
      %20 = vector.broadcast %c405_i32_8 : i32 to vector<408x128xi32>
      %21 = arith.cmpi slt, %19, %20 : vector<408x128xi32>
      %c0_9 = arith.constant 0 : index
      %c0_10 = arith.constant 0 : index
      %c0_11 = arith.constant 0 : index
      %22 = vector.load %arg4[%c0_9, %c0_10, %c0_11] : memref<1x8x128xf32, #tpu.memory_space<vmem>>, vector<1x8x128xf32>
      %cst = arith.constant 0.000000e+00 : f32
      %23 = vector.broadcast %cst : f32 to vector<408x128xf32>
      %24 = arith.select %21, %6, %23 : vector<408x128xi1>, vector<408x128xf32>
      %25 = vector.shape_cast %24 : vector<408x128xf32> to vector<1x51x8x128xf32>
      %cst_12 = arith.constant dense<0.000000e+00> : vector<1x8x128xf32>
      %26 = vector.multi_reduction <add>, %25, %cst_12 [1] : vector<1x51x8x128xf32> to vector<1x8x128xf32>
      %27 = arith.addf %22, %26 : vector<1x8x128xf32>
      %c0_13 = arith.constant 0 : index
      %c0_14 = arith.constant 0 : index
      %c0_15 = arith.constant 0 : index
      %28 = vector.load %arg4[%c0_13, %c0_14, %c0_15] : memref<1x8x128xf32, #tpu.memory_space<vmem>>, vector<1x8x128xf32>
      tpu.vector_store %arg4[%c0_13, %c0_14, %c0_15], %27 {strides = array<i32>} : memref<1x8x128xf32, #tpu.memory_space<vmem>>, vector<1x8x128xf32>,
    } else {
    }
    return
  }
  func.func @transform_0(%arg0: i32, %arg1: i32) -> (i32, i32) {
    %c1_i32 = arith.constant 1 : i32
    %0 = arith.muli %arg0, %c1_i32 : i32
    %1 = arith.addi %0, %arg1 : i32
    %c0_i32 = arith.constant 0 : i32
    %c0_i32_0 = arith.constant 0 : i32
    return %1, %c0_i32 : i32, i32
  }
  func.func @transform_1(%arg0: i32, %arg1: i32) -> (i32, i32) {
    %c1_i32 = arith.constant 1 : i32
    %0 = arith.muli %arg0, %c1_i32 : i32
    %1 = arith.addi %0, %arg1 : i32
    %c0_i32 = arith.constant 0 : i32
    %c0_i32_0 = arith.constant 0 : i32
    return %1, %c0_i32 : i32, i32
  }
  func.func @transform_2(%arg0: i32, %arg1: i32) -> (i32, i32, i32) {
    %c0_i32 = arith.constant 0 : i32
    %c0_i32_0 = arith.constant 0 : i32
    %c0_i32_1 = arith.constant 0 : i32
    return %arg0, %c0_i32, %c0_i32_0 : i32, i32, i32
  }
}

</mosaic_0001>

<llo_original>
// kernel: tpu_custom_call.1
$region0: #{tpu_custom_call.1}
  #allocation0 [shape = 'u32[]', space=smem, size = 0x4, offset = 0x4, fixed_abs, tag = 'smem constant byte address 0x4 - core index']
  #allocation1 [shape = 'u32[144,128]{1,0:T(1,128)}', space=vmem, size = 0x12000, scoped, tag = 'internal scratch']
  %s0 = inlined_call_operand.hbm [shape: f32[405,128], index: 0, kind: input, shape index: {}]
  %s1 = inlined_call_operand.hbm [shape: f32[405,128], index: 1, kind: input, shape index: {}]
  %s2 = inlined_call_operand.hbm [shape: f32[1,8,128], index: 2, kind: output, shape index: {}]
  %s3 = sld [smem:[#allocation0]]
  $region38: #{tpu_custom_call.1} parent=0
    _
  %s5 = ssub.s32 1, %s3
  %s6 = scalar_select 0, %s5, %s3
  $region1: #{tpu_custom_call.1} parent=0
    #allocation2 [shape = 'u8[208896]{0}', space=vmem, size = 0x33000, scoped, tag = 'input window, operand 0, single buffered']
    #allocation3 [shape = 's32[1]{0}', space=sflag, size = 0x4, scoped, tag = 'scoped memory for tpu_custom_call.1']
    #allocation4 [shape = 's32[1]{0}', space=sflag, size = 0x4, scoped, tag = 'scoped memory for tpu_custom_call.1']
    #allocation5 [shape = 'u8[208896]{0}', space=vmem, size = 0x33000, scoped, tag = 'input window, operand 1, single buffered']
    #allocation6 [shape = 's32[1]{0}', space=sflag, size = 0x4, scoped, tag = 'scoped memory for tpu_custom_call.1']
    #allocation7 [shape = 'u8[4096]{0}', space=vmem, size = 0x1000, scoped, tag = 'output window, operand 0, single buffered']
    %7 = vsyncpa [#allocation3], 0
    %8 = vsyncpa [#allocation6], 0
    %9 = vsyncpa [#allocation4], 0
    // Predicated region
    $region2: #{tpu_custom_call.1} parent=1 // pred_check
      _
    $region3: #{tpu_custom_call.1} parent=1 // pred_check_branch
      %11 = sbr.rel (0) target = $region5
    $region4: #{tpu_custom_call.1} parent=1 // pred_region
      %s12 = sadd.s32 0, 0
      %s13 = smul.u32 51, %s12
      %s15 = ssub.s32 6528, 6528
      %16 = vsyncadd [#allocation3], %s15
      %s17 = smul.addr %s13, 128
      %s18 = scalar_lea.hbm %s0, %s17
      %s19 = sshll.u32 [#allocation2], 4
      %s20 = int_to_ptr.vmem [resolvable:$true] %s19
      %25 = dma.hbm_to_vmem [thread:$0]  %s18, 6528, %s20, [#allocation3], 128, 128, 8
    $region5: #{tpu_custom_call.1} parent=1 // pred_fallthru
      _
    // Predicated region
    $region6: #{tpu_custom_call.1} parent=1 // pred_check
      _
    $region7: #{tpu_custom_call.1} parent=1 // pred_check_branch
      %27 = sbr.rel (0) target = $region9
    $region8: #{tpu_custom_call.1} parent=1 // pred_region
      %s28 = sadd.s32 0, 0
      %s29 = smul.u32 51, %s28
      %s31 = ssub.s32 6528, 6528
      %32 = vsyncadd [#allocation6], %s31
      %s33 = smul.addr %s29, 128
      %s34 = scalar_lea.hbm %s1, %s33
      %s35 = sshll.u32 [#allocation5], 4
      %s36 = int_to_ptr.vmem [resolvable:$true] %s35
      %41 = dma.hbm_to_vmem [thread:$0]  %s34, 6528, %s36, [#allocation6], 128, 128, 8
    $region9: #{tpu_custom_call.1} parent=1 // pred_fallthru
      _
    // Predicated region
    $region10: #{tpu_custom_call.1} parent=1 // pred_check
      _
    $region11: #{tpu_custom_call.1} parent=1 // pred_check_branch
      %43 = sbr.rel (0) target = $region13
    $region12: #{tpu_custom_call.1} parent=1 // pred_region
      %44 = dma.done [#allocation3], 6528
    $region13: #{tpu_custom_call.1} parent=1 // pred_fallthru
      _
    // Predicated region
    $region14: #{tpu_custom_call.1} parent=1 // pred_check
      _
    $region15: #{tpu_custom_call.1} parent=1 // pred_check_branch
      %46 = sbr.rel (0) target = $region17
    $region16: #{tpu_custom_call.1} parent=1 // pred_region
      %47 = dma.done [#allocation6], 6528
    $region17: #{tpu_custom_call.1} parent=1 // pred_fallthru
      _
    %s48 = sadd.s32 0, 0
    %s49 = smul.u32 51, %s48
    %s50 = sadd.s32 0, 0
    %s51 = smul.u32 51, %s50
    %p52 = scmp.eq.s32.totalorder 0, 0
    // Predicated region
    $region18: #{tpu_custom_call.1} parent=1 // pred_check
      %p53 = pneg %p52
    $region19: #{tpu_custom_call.1} parent=1 // pred_check_branch
      %55 = sbr.rel (%p53) target = $region21
    $region20: #{tpu_custom_call.1} parent=1 // pred_region
      %56 = vst [vmem:[#allocation7] sm:$0xff] 0.0
    $region21: #{tpu_custom_call.1} parent=1 // pred_fallthru
      _
    %v57 = vld [vmem:[#allocation2] sm:$0xff]
    %v58 = vld [vmem:[#allocation2 + $0x8] sm:$0xff]
    %v59 = vld [vmem:[#allocation2 + $0x10] sm:$0xff]
    %v60 = vld [vmem:[#allocation2 + $0x18] sm:$0xff]
    %v61 = vld [vmem:[#allocation2 + $0x20] sm:$0xff]
    %v62 = vld [vmem:[#allocation2 + $0x28] sm:$0xff]
    %v63 = vld [vmem:[#allocation2 + $0x30] sm:$0xff]
    %v64 = vld [vmem:[#allocation2 + $0x38] sm:$0xff]
    %v65 = vld [vmem:[#allocation2 + $0x40] sm:$0xff]
    %v66 = vld [vmem:[#allocation2 + $0x48] sm:$0xff]
    %v67 = vld [vmem:[#allocation2 + $0x50] sm:$0xff]
    %v68 = vld [vmem:[#allocation2 + $0x58] sm:$0xff]
    %v69 = vld [vmem:[#allocation2 + $0x60] sm:$0xff]
    %v70 = vld [vmem:[#allocation2 + $0x68] sm:$0xff]
    %v71 = vld [vmem:[#allocation2 + $0x70] sm:$0xff]
    %v72 = vld [vmem:[#allocation2 + $0x78] sm:$0xff]
    %v73 = vld [vmem:[#allocation2 + $0x80] sm:$0xff]
    %v74 = vld [vmem:[#allocation2 + $0x88] sm:$0xff]
    %v75 = vld [vmem:[#allocation2 + $0x90] sm:$0xff]
    %v76 = vld [vmem:[#allocation2 + $0x98] sm:$0xff]
    %v77 = vld [vmem:[#allocation2 + $0xa0] sm:$0xff]
    %v78 = vld [vmem:[#allocation2 + $0xa8] sm:$0xff]
    %v79 = vld [vmem:[#allocation2 + $0xb0] sm:$0xff]
    %v80 = vld [vmem:[#allocation2 + $0xb8] sm:$0xff]
    %v81 = vld [vmem:[#allocation2 + $0xc0] sm:$0xff]
    %v82 = vld [vmem:[#allocation2 + $0xc8] sm:$0xff]
    %v83 = vld [vmem:[#allocation2 + $0xd0] sm:$0xff]
    %v84 = vld [vmem:[#allocation2 + $0xd8] sm:$0xff]
    %v85 = vld [vmem:[#allocation2 + $0xe0] sm:$0xff]
    %v86 = vld [vmem:[#allocation2 + $0xe8] sm:$0xff]
    %v87 = vld [vmem:[#allocation2 + $0xf0] sm:$0xff]
    %v88 = vld [vmem:[#allocation2 + $0xf8] sm:$0xff]
    %v89 = vld [vmem:[#allocation2 + $0x100] sm:$0xff]
    %v90 = vld [vmem:[#allocation2 + $0x108] sm:$0xff]
    %v91 = vld [vmem:[#allocation2 + $0x110] sm:$0xff]
    %v92 = vld [vmem:[#allocation2 + $0x118] sm:$0xff]
    %v93 = vld [vmem:[#allocation2 + $0x120] sm:$0xff]
    %v94 = vld [vmem:[#allocation2 + $0x128] sm:$0xff]
    %v95 = vld [vmem:[#allocation2 + $0x130] sm:$0xff]
    %v96 = vld [vmem:[#allocation2 + $0x138] sm:$0xff]
    %v97 = vld [vmem:[#allocation2 + $0x140] sm:$0xff]
    %v98 = vld [vmem:[#allocation2 + $0x148] sm:$0xff]
    %v99 = vld [vmem:[#allocation2 + $0x150] sm:$0xff]
    %v100 = vld [vmem:[#allocation2 + $0x158] sm:$0xff]
    %v101 = vld [vmem:[#allocation2 + $0x160] sm:$0xff]
    %v102 = vld [vmem:[#allocation2 + $0x168] sm:$0xff]
    %v103 = vld [vmem:[#allocation2 + $0x170] sm:$0xff]
    %v104 = vld [vmem:[#allocation2 + $0x178] sm:$0xff]
    %v105 = vld [vmem:[#allocation2 + $0x180] sm:$0xff]
    %v106 = vld [vmem:[#allocation2 + $0x188] sm:$0xff]
    %v107 = vld [vmem:[#allocation2 + $0x190] sm:$0xff]
    %v108 = vld [vmem:[#allocation5] sm:$0xff]
    %v109 = vld [vmem:[#allocation5 + $0x8] sm:$0xff]
    %v110 = vld [vmem:[#allocation5 + $0x10] sm:$0xff]
    %v111 = vld [vmem:[#allocation5 + $0x18] sm:$0xff]
    %v112 = vld [vmem:[#allocation5 + $0x20] sm:$0xff]
    %v113 = vld [vmem:[#allocation5 + $0x28] sm:$0xff]
    %v114 = vld [vmem:[#allocation5 + $0x30] sm:$0xff]
    %v115 = vld [vmem:[#allocation5 + $0x38] sm:$0xff]
    %v116 = vld [vmem:[#allocation5 + $0x40] sm:$0xff]
    %v117 = vld [vmem:[#allocation5 + $0x48] sm:$0xff]
    %v118 = vld [vmem:[#allocation5 + $0x50] sm:$0xff]
    %v119 = vld [vmem:[#allocation5 + $0x58] sm:$0xff]
    %v120 = vld [vmem:[#allocation5 + $0x60] sm:$0xff]
    %v121 = vld [vmem:[#allocation5 + $0x68] sm:$0xff]
    %v122 = vld [vmem:[#allocation5 + $0x70] sm:$0xff]
    %v123 = vld [vmem:[#allocation5 + $0x78] sm:$0xff]
    %v124 = vld [vmem:[#allocation5 + $0x80] sm:$0xff]
    %v125 = vld [vmem:[#allocation5 + $0x88] sm:$0xff]
    %v126 = vld [vmem:[#allocation5 + $0x90] sm:$0xff]
    %v127 = vld [vmem:[#allocation5 + $0x98] sm:$0xff]
    %v128 = vld [vmem:[#allocation5 + $0xa0] sm:$0xff]
    %v129 = vld [vmem:[#allocation5 + $0xa8] sm:$0xff]
    %v130 = vld [vmem:[#allocation5 + $0xb0] sm:$0xff]
    %v131 = vld [vmem:[#allocation5 + $0xb8] sm:$0xff]
    %v132 = vld [vmem:[#allocation5 + $0xc0] sm:$0xff]
    %v133 = vld [vmem:[#allocation5 + $0xc8] sm:$0xff]
    %v134 = vld [vmem:[#allocation5 + $0xd0] sm:$0xff]
    %v135 = vld [vmem:[#allocation5 + $0xd8] sm:$0xff]
    %v136 = vld [vmem:[#allocation5 + $0xe0] sm:$0xff]
    %v137 = vld [vmem:[#allocation5 + $0xe8] sm:$0xff]
    %v138 = vld [vmem:[#allocation5 + $0xf0] sm:$0xff]
    %v139 = vld [vmem:[#allocation5 + $0xf8] sm:$0xff]
    %v140 = vld [vmem:[#allocation5 + $0x100] sm:$0xff]
    %v141 = vld [vmem:[#allocation5 + $0x108] sm:$0xff]
    %v142 = vld [vmem:[#allocation5 + $0x110] sm:$0xff]
    %v143 = vld [vmem:[#allocation5 + $0x118] sm:$0xff]
    %v144 = vld [vmem:[#allocation5 + $0x120] sm:$0xff]
    %v145 = vld [vmem:[#allocation5 + $0x128] sm:$0xff]
    %v146 = vld [vmem:[#allocation5 + $0x130] sm:$0xff]
    %v147 = vld [vmem:[#allocation5 + $0x138] sm:$0xff]
    %v148 = vld [vmem:[#allocation5 + $0x140] sm:$0xff]
    %v149 = vld [vmem:[#allocation5 + $0x148] sm:$0xff]
    %v150 = vld [vmem:[#allocation5 + $0x150] sm:$0xff]
    %v151 = vld [vmem:[#allocation5 + $0x158] sm:$0xff]
    %v152 = vld [vmem:[#allocation5 + $0x160] sm:$0xff]
    %v153 = vld [vmem:[#allocation5 + $0x168] sm:$0xff]
    %v154 = vld [vmem:[#allocation5 + $0x170] sm:$0xff]
    %v155 = vld [vmem:[#allocation5 + $0x178] sm:$0xff]
    %v156 = vld [vmem:[#allocation5 + $0x180] sm:$0xff]
    %v157 = vld [vmem:[#allocation5 + $0x188] sm:$0xff]
    %v158 = vld [vmem:[#allocation5 + $0x190] sm:$0xff]
    %v159 = vsub.f32 %v57, %v108
    %v160 = vsub.f32 %v58, %v109
    %v161 = vsub.f32 %v59, %v110
    %v162 = vsub.f32 %v60, %v111
    %v163 = vsub.f32 %v61, %v112
    %v164 = vsub.f32 %v62, %v113
    %v165 = vsub.f32 %v63, %v114
    %v166 = vsub.f32 %v64, %v115
    %v167 = vsub.f32 %v65, %v116
    %v168 = vsub.f32 %v66, %v117
    %v169 = vsub.f32 %v67, %v118
    %v170 = vsub.f32 %v68, %v119
    %v171 = vsub.f32 %v69, %v120
    %v172 = vsub.f32 %v70, %v121
    %v173 = vsub.f32 %v71, %v122
    %v174 = vsub.f32 %v72, %v123
    %v175 = vsub.f32 %v73, %v124
    %v176 = vsub.f32 %v74, %v125
    %v177 = vsub.f32 %v75, %v126
    %v178 = vsub.f32 %v76, %v127
    %v179 = vsub.f32 %v77, %v128
    %v180 = vsub.f32 %v78, %v129
    %v181 = vsub.f32 %v79, %v130
    %v182 = vsub.f32 %v80, %v131
    %v183 = vsub.f32 %v81, %v132
    %v184 = vsub.f32 %v82, %v133
    %v185 = vsub.f32 %v83, %v134
    %v186 = vsub.f32 %v84, %v135
    %v187 = vsub.f32 %v85, %v136
    %v188 = vsub.f32 %v86, %v137
    %v189 = vsub.f32 %v87, %v138
    %v190 = vsub.f32 %v88, %v139
    %v191 = vsub.f32 %v89, %v140
    %v192 = vsub.f32 %v90, %v141
    %v193 = vsub.f32 %v91, %v142
    %v194 = vsub.f32 %v92, %v143
    %v195 = vsub.f32 %v93, %v144
    %v196 = vsub.f32 %v94, %v145
    %v197 = vsub.f32 %v95, %v146
    %v198 = vsub.f32 %v96, %v147
    %v199 = vsub.f32 %v97, %v148
    %v200 = vsub.f32 %v98, %v149
    %v201 = vsub.f32 %v99, %v150
    %v202 = vsub.f32 %v100, %v151
    %v203 = vsub.f32 %v101, %v152
    %v204 = vsub.f32 %v102, %v153
    %v205 = vsub.f32 %v103, %v154
    %v206 = vsub.f32 %v104, %v155
    %v207 = vsub.f32 %v105, %v156
    %v208 = vsub.f32 %v106, %v157
    %v209 = vsub.f32 %v107, %v158
    %v210 = vmul.f32 %v159, %v159
    %v211 = vmul.f32 %v160, %v160
    %v212 = vmul.f32 %v161, %v161
    %v213 = vmul.f32 %v162, %v162
    %v214 = vmul.f32 %v163, %v163
    %v215 = vmul.f32 %v164, %v164
    %v216 = vmul.f32 %v165, %v165
    %v217 = vmul.f32 %v166, %v166
    %v218 = vmul.f32 %v167, %v167
    %v219 = vmul.f32 %v168, %v168
    %v220 = vmul.f32 %v169, %v169
    %v221 = vmul.f32 %v170, %v170
    %v222 = vmul.f32 %v171, %v171
    %v223 = vmul.f32 %v172, %v172
    %v224 = vmul.f32 %v173, %v173
    %v225 = vmul.f32 %v174, %v174
    %v226 = vmul.f32 %v175, %v175
    %v227 = vmul.f32 %v176, %v176
    %v228 = vmul.f32 %v177, %v177
    %v229 = vmul.f32 %v178, %v178
    %v230 = vmul.f32 %v179, %v179
    %v231 = vmul.f32 %v180, %v180
    %v232 = vmul.f32 %v181, %v181
    %v233 = vmul.f32 %v182, %v182
    %v234 = vmul.f32 %v183, %v183
    %v235 = vmul.f32 %v184, %v184
    %v236 = vmul.f32 %v185, %v185
    %v237 = vmul.f32 %v186, %v186
    %v238 = vmul.f32 %v187, %v187
    %v239 = vmul.f32 %v188, %v188
    %v240 = vmul.f32 %v189, %v189
    %v241 = vmul.f32 %v190, %v190
    %v242 = vmul.f32 %v191, %v191
    %v243 = vmul.f32 %v192, %v192
    %v244 = vmul.f32 %v193, %v193
    %v245 = vmul.f32 %v194, %v194
    %v246 = vmul.f32 %v195, %v195
    %v247 = vmul.f32 %v196, %v196
    %v248 = vmul.f32 %v197, %v197
    %v249 = vmul.f32 %v198, %v198
    %v250 = vmul.f32 %v199, %v199
    %v251 = vmul.f32 %v200, %v200
    %v252 = vmul.f32 %v201, %v201
    %v253 = vmul.f32 %v202, %v202
    %v254 = vmul.f32 %v203, %v203
    %v255 = vmul.f32 %v204, %v204
    %v256 = vmul.f32 %v205, %v205
    %v257 = vmul.f32 %v206, %v206
    %v258 = vmul.f32 %v207, %v207
    %v259 = vmul.f32 %v208, %v208
    %v260 = vmul.f32 %v209, %v209
    %s261 = sadd.s32 0, 0
    %s262 = smul.u32 %s261, 408
    %s263 = sadd.s32 %s262, 408
    %p264 = scmp.le.s32.totalorder %s263, 405
    // Predicated region
    $region22: #{tpu_custom_call.1} parent=1 // pred_check
      %p265 = pneg %p264
    $region23: #{tpu_custom_call.1} parent=1 // pred_check_branch
      %267 = sbr.rel (%p265) target = $region25
    $region24: #{tpu_custom_call.1} parent=1 // pred_region
      %v268 = vld [vmem:[#allocation7] sm:$0xff]
      %v269 = vadd.f32 %v210, %v211
      %v270 = vadd.f32 %v269, %v212
      %v271 = vadd.f32 %v270, %v213
      %v272 = vadd.f32 %v271, %v214
      %v273 = vadd.f32 %v272, %v215
      %v274 = vadd.f32 %v273, %v216
      %v275 = vadd.f32 %v274, %v217
      %v276 = vadd.f32 %v275, %v218
      %v277 = vadd.f32 %v276, %v219
      %v278 = vadd.f32 %v277, %v220
      %v279 = vadd.f32 %v278, %v221
      %v280 = vadd.f32 %v279, %v222
      %v281 = vadd.f32 %v280, %v223
      %v282 = vadd.f32 %v281, %v224
      %v283 = vadd.f32 %v282, %v225
      %v284 = vadd.f32 %v283, %v226
      %v285 = vadd.f32 %v284, %v227
      %v286 = vadd.f32 %v285, %v228
      %v287 = vadd.f32 %v286, %v229
      %v288 = vadd.f32 %v287, %v230
      %v289 = vadd.f32 %v288, %v231
      %v290 = vadd.f32 %v289, %v232
      %v291 = vadd.f32 %v290, %v233
      %v292 = vadd.f32 %v291, %v234
      %v293 = vadd.f32 %v292, %v235
      %v294 = vadd.f32 %v293, %v236
      %v295 = vadd.f32 %v294, %v237
      %v296 = vadd.f32 %v295, %v238
      %v297 = vadd.f32 %v296, %v239
      %v298 = vadd.f32 %v297, %v240
      %v299 = vadd.f32 %v298, %v241
      %v300 = vadd.f32 %v299, %v242
      %v301 = vadd.f32 %v300, %v243
      %v302 = vadd.f32 %v301, %v244
      %v303 = vadd.f32 %v302, %v245
      %v304 = vadd.f32 %v303, %v246
      %v305 = vadd.f32 %v304, %v247
      %v306 = vadd.f32 %v305, %v248
      %v307 = vadd.f32 %v306, %v249
      %v308 = vadd.f32 %v307, %v250
      %v309 = vadd.f32 %v308, %v251
      %v310 = vadd.f32 %v309, %v252
      %v311 = vadd.f32 %v310, %v253
      %v312 = vadd.f32 %v311, %v254
      %v313 = vadd.f32 %v312, %v255
      %v314 = vadd.f32 %v313, %v256
      %v315 = vadd.f32 %v314, %v257
      %v316 = vadd.f32 %v315, %v258
      %v317 = vadd.f32 %v316, %v259
      %v318 = vadd.f32 %v317, %v260
      %v319 = vadd.f32 %v268, %v318
      %320 = vst [vmem:[#allocation7] sm:$0xff] %v319
    $region25: #{tpu_custom_call.1} parent=1 // pred_fallthru
      _
    %p321 = scmp.gt.s32.totalorder %s263, 405
    // Predicated region
    $region26: #{tpu_custom_call.1} parent=1 // pred_check
      %p322 = pneg %p321
    $region27: #{tpu_custom_call.1} parent=1 // pred_check_branch
      %324 = sbr.rel (%p322) target = $region29
    $region28: #{tpu_custom_call.1} parent=1 // pred_region
      %v325 = vlaneseq
      %v326 = vshrl.u32 %v325, 7
      %v327 = vadd.s32 %v326, 8
      %v328 = vadd.s32 %v326, 16
      %v329 = vadd.s32 %v326, 24
      %v330 = vadd.s32 %v326, 32
      %v331 = vadd.s32 %v326, 40
      %v332 = vadd.s32 %v326, 48
      %v333 = vadd.s32 %v326, 56
      %v334 = vadd.s32 %v326, 64
      %v335 = vadd.s32 %v326, 72
      %v336 = vadd.s32 %v326, 80
      %v337 = vadd.s32 %v326, 88
      %v338 = vadd.s32 %v326, 96
      %v339 = vadd.s32 %v326, 104
      %v340 = vadd.s32 %v326, 112
      %v341 = vadd.s32 %v326, 120
      %v342 = vadd.s32 %v326, 128
      %v343 = vadd.s32 %v326, 136
      %v344 = vadd.s32 %v326, 144
      %v345 = vadd.s32 %v326, 152
      %v346 = vadd.s32 %v326, 160
      %v347 = vadd.s32 %v326, 168
      %v348 = vadd.s32 %v326, 176
      %v349 = vadd.s32 %v326, 184
      %v350 = vadd.s32 %v326, 192
      %v351 = vadd.s32 %v326, 200
      %v352 = vadd.s32 %v326, 208
      %v353 = vadd.s32 %v326, 216
      %v354 = vadd.s32 %v326, 224
      %v355 = vadd.s32 %v326, 232
      %v356 = vadd.s32 %v326, 240
      %v357 = vadd.s32 %v326, 248
      %v358 = vadd.s32 %v326, 256
      %v359 = vadd.s32 %v326, 264
      %v360 = vadd.s32 %v326, 272
      %v361 = vadd.s32 %v326, 280
      %v362 = vadd.s32 %v326, 288
      %v363 = vadd.s32 %v326, 296
      %v364 = vadd.s32 %v326, 304
      %v365 = vadd.s32 %v326, 312
      %v366 = vadd.s32 %v326, 320
      %v367 = vadd.s32 %v326, 328
      %v368 = vadd.s32 %v326, 336
      %v369 = vadd.s32 %v326, 344
      %v370 = vadd.s32 %v326, 352
      %v371 = vadd.s32 %v326, 360
      %v372 = vadd.s32 %v326, 368
      %v373 = vadd.s32 %v326, 376
      %v374 = vadd.s32 %v326, 384
      %v375 = vadd.s32 %v326, 392
      %v376 = vadd.s32 %v326, 400
      %v377 = vstv %s262
      %v378 = vadd.s32 %v377, %v326
      %v379 = vadd.s32 %v377, %v327
      %v380 = vadd.s32 %v377, %v328
      %v381 = vadd.s32 %v377, %v329
      %v382 = vadd.s32 %v377, %v330
      %v383 = vadd.s32 %v377, %v331
      %v384 = vadd.s32 %v377, %v332
      %v385 = vadd.s32 %v377, %v333
      %v386 = vadd.s32 %v377, %v334
      %v387 = vadd.s32 %v377, %v335
      %v388 = vadd.s32 %v377, %v336
      %v389 = vadd.s32 %v377, %v337
      %v390 = vadd.s32 %v377, %v338
      %v391 = vadd.s32 %v377, %v339
      %v392 = vadd.s32 %v377, %v340
      %v393 = vadd.s32 %v377, %v341
      %v394 = vadd.s32 %v377, %v342
      %v395 = vadd.s32 %v377, %v343
      %v396 = vadd.s32 %v377, %v344
      %v397 = vadd.s32 %v377, %v345
      %v398 = vadd.s32 %v377, %v346
      %v399 = vadd.s32 %v377, %v347
      %v400 = vadd.s32 %v377, %v348
      %v401 = vadd.s32 %v377, %v349
      %v402 = vadd.s32 %v377, %v350
      %v403 = vadd.s32 %v377, %v351
      %v404 = vadd.s32 %v377, %v352
      %v405 = vadd.s32 %v377, %v353
      %v406 = vadd.s32 %v377, %v354
      %v407 = vadd.s32 %v377, %v355
      %v408 = vadd.s32 %v377, %v356
      %v409 = vadd.s32 %v377, %v357
      %v410 = vadd.s32 %v377, %v358
      %v411 = vadd.s32 %v377, %v359
      %v412 = vadd.s32 %v377, %v360
      %v413 = vadd.s32 %v377, %v361
      %v414 = vadd.s32 %v377, %v362
      %v415 = vadd.s32 %v377, %v363
      %v416 = vadd.s32 %v377, %v364
      %v417 = vadd.s32 %v377, %v365
      %v418 = vadd.s32 %v377, %v366
      %v419 = vadd.s32 %v377, %v367
      %v420 = vadd.s32 %v377, %v368
      %v421 = vadd.s32 %v377, %v369
      %v422 = vadd.s32 %v377, %v370
      %v423 = vadd.s32 %v377, %v371
      %v424 = vadd.s32 %v377, %v372
      %v425 = vadd.s32 %v377, %v373
      %v426 = vadd.s32 %v377, %v374
      %v427 = vadd.s32 %v377, %v375
      %v428 = vadd.s32 %v377, %v376
      %vm429 = vcmp.lt.s32.totalorder %v378, 405
      %vm430 = vcmp.lt.s32.totalorder %v379, 405
      %vm431 = vcmp.lt.s32.totalorder %v380, 405
      %vm432 = vcmp.lt.s32.totalorder %v381, 405
      %vm433 = vcmp.lt.s32.totalorder %v382, 405
      %vm434 = vcmp.lt.s32.totalorder %v383, 405
      %vm435 = vcmp.lt.s32.totalorder %v384, 405
      %vm436 = vcmp.lt.s32.totalorder %v385, 405
      %vm437 = vcmp.lt.s32.totalorder %v386, 405
      %vm438 = vcmp.lt.s32.totalorder %v387, 405
      %vm439 = vcmp.lt.s32.totalorder %v388, 405
      %vm440 = vcmp.lt.s32.totalorder %v389, 405
      %vm441 = vcmp.lt.s32.totalorder %v390, 405
      %vm442 = vcmp.lt.s32.totalorder %v391, 405
      %vm443 = vcmp.lt.s32.totalorder %v392, 405
      %vm444 = vcmp.lt.s32.totalorder %v393, 405
      %vm445 = vcmp.lt.s32.totalorder %v394, 405
      %vm446 = vcmp.lt.s32.totalorder %v395, 405
      %vm447 = vcmp.lt.s32.totalorder %v396, 405
      %vm448 = vcmp.lt.s32.totalorder %v397, 405
      %vm449 = vcmp.lt.s32.totalorder %v398, 405
      %vm450 = vcmp.lt.s32.totalorder %v399, 405
      %vm451 = vcmp.lt.s32.totalorder %v400, 405
      %vm452 = vcmp.lt.s32.totalorder %v401, 405
      %vm453 = vcmp.lt.s32.totalorder %v402, 405
      %vm454 = vcmp.lt.s32.totalorder %v403, 405
      %vm455 = vcmp.lt.s32.totalorder %v404, 405
      %vm456 = vcmp.lt.s32.totalorder %v405, 405
      %vm457 = vcmp.lt.s32.totalorder %v406, 405
      %vm458 = vcmp.lt.s32.totalorder %v407, 405
      %vm459 = vcmp.lt.s32.totalorder %v408, 405
      %vm460 = vcmp.lt.s32.totalorder %v409, 405
      %vm461 = vcmp.lt.s32.totalorder %v410, 405
      %vm462 = vcmp.lt.s32.totalorder %v411, 405
      %vm463 = vcmp.lt.s32.totalorder %v412, 405
      %vm464 = vcmp.lt.s32.totalorder %v413, 405
      %vm465 = vcmp.lt.s32.totalorder %v414, 405
      %vm466 = vcmp.lt.s32.totalorder %v415, 405
      %vm467 = vcmp.lt.s32.totalorder %v416, 405
      %vm468 = vcmp.lt.s32.totalorder %v417, 405
      %vm469 = vcmp.lt.s32.totalorder %v418, 405
      %vm470 = vcmp.lt.s32.totalorder %v419, 405
      %vm471 = vcmp.lt.s32.totalorder %v420, 405
      %vm472 = vcmp.lt.s32.totalorder %v421, 405
      %vm473 = vcmp.lt.s32.totalorder %v422, 405
      %vm474 = vcmp.lt.s32.totalorder %v423, 405
      %vm475 = vcmp.lt.s32.totalorder %v424, 405
      %vm476 = vcmp.lt.s32.totalorder %v425, 405
      %vm477 = vcmp.lt.s32.totalorder %v426, 405
      %vm478 = vcmp.lt.s32.totalorder %v427, 405
      %vm479 = vcmp.lt.s32.totalorder %v428, 405
      %v480 = vld [vmem:[#allocation7] sm:$0xff]
      %v481 = vsel %vm429, %v210, 0.0
      %v482 = vsel %vm430, %v211, 0.0
      %v483 = vsel %vm431, %v212, 0.0
      %v484 = vsel %vm432, %v213, 0.0
      %v485 = vsel %vm433, %v214, 0.0
      %v486 = vsel %vm434, %v215, 0.0
      %v487 = vsel %vm435, %v216, 0.0
      %v488 = vsel %vm436, %v217, 0.0
      %v489 = vsel %vm437, %v218, 0.0
      %v490 = vsel %vm438, %v219, 0.0
      %v491 = vsel %vm439, %v220, 0.0
      %v492 = vsel %vm440, %v221, 0.0
      %v493 = vsel %vm441, %v222, 0.0
      %v494 = vsel %vm442, %v223, 0.0
      %v495 = vsel %vm443, %v224, 0.0
      %v496 = vsel %vm444, %v225, 0.0
      %v497 = vsel %vm445, %v226, 0.0
      %v498 = vsel %vm446, %v227, 0.0
      %v499 = vsel %vm447, %v228, 0.0
      %v500 = vsel %vm448, %v229, 0.0
      %v501 = vsel %vm449, %v230, 0.0
      %v502 = vsel %vm450, %v231, 0.0
      %v503 = vsel %vm451, %v232, 0.0
      %v504 = vsel %vm452, %v233, 0.0
      %v505 = vsel %vm453, %v234, 0.0
      %v506 = vsel %vm454, %v235, 0.0
      %v507 = vsel %vm455, %v236, 0.0
      %v508 = vsel %vm456, %v237, 0.0
      %v509 = vsel %vm457, %v238, 0.0
      %v510 = vsel %vm458, %v239, 0.0
      %v511 = vsel %vm459, %v240, 0.0
      %v512 = vsel %vm460, %v241, 0.0
      %v513 = vsel %vm461, %v242, 0.0
      %v514 = vsel %vm462, %v243, 0.0
      %v515 = vsel %vm463, %v244, 0.0
      %v516 = vsel %vm464, %v245, 0.0
      %v517 = vsel %vm465, %v246, 0.0
      %v518 = vsel %vm466, %v247, 0.0
      %v519 = vsel %vm467, %v248, 0.0
      %v520 = vsel %vm468, %v249, 0.0
      %v521 = vsel %vm469, %v250, 0.0
      %v522 = vsel %vm470, %v251, 0.0
      %v523 = vsel %vm471, %v252, 0.0
      %v524 = vsel %vm472, %v253, 0.0
      %v525 = vsel %vm473, %v254, 0.0
      %v526 = vsel %vm474, %v255, 0.0
      %v527 = vsel %vm475, %v256, 0.0
      %v528 = vsel %vm476, %v257, 0.0
      %v529 = vsel %vm477, %v258, 0.0
      %v530 = vsel %vm478, %v259, 0.0
      %v531 = vsel %vm479, %v260, 0.0
      %v532 = vadd.f32 %v481, %v482
      %v533 = vadd.f32 %v532, %v483
      %v534 = vadd.f32 %v533, %v484
      %v535 = vadd.f32 %v534, %v485
      %v536 = vadd.f32 %v535, %v486
      %v537 = vadd.f32 %v536, %v487
      %v538 = vadd.f32 %v537, %v488
      %v539 = vadd.f32 %v538, %v489
      %v540 = vadd.f32 %v539, %v490
      %v541 = vadd.f32 %v540, %v491
      %v542 = vadd.f32 %v541, %v492
      %v543 = vadd.f32 %v542, %v493
      %v544 = vadd.f32 %v543, %v494
      %v545 = vadd.f32 %v544, %v495
      %v546 = vadd.f32 %v545, %v496
      %v547 = vadd.f32 %v546, %v497
      %v548 = vadd.f32 %v547, %v498
      %v549 = vadd.f32 %v548, %v499
      %v550 = vadd.f32 %v549, %v500
      %v551 = vadd.f32 %v550, %v501
      %v552 = vadd.f32 %v551, %v502
      %v553 = vadd.f32 %v552, %v503
      %v554 = vadd.f32 %v553, %v504
      %v555 = vadd.f32 %v554, %v505
      %v556 = vadd.f32 %v555, %v506
      %v557 = vadd.f32 %v556, %v507
      %v558 = vadd.f32 %v557, %v508
      %v559 = vadd.f32 %v558, %v509
      %v560 = vadd.f32 %v559, %v510
      %v561 = vadd.f32 %v560, %v511
      %v562 = vadd.f32 %v561, %v512
      %v563 = vadd.f32 %v562, %v513
      %v564 = vadd.f32 %v563, %v514
      %v565 = vadd.f32 %v564, %v515
      %v566 = vadd.f32 %v565, %v516
      %v567 = vadd.f32 %v566, %v517
      %v568 = vadd.f32 %v567, %v518
      %v569 = vadd.f32 %v568, %v519
      %v570 = vadd.f32 %v569, %v520
      %v571 = vadd.f32 %v570, %v521
      %v572 = vadd.f32 %v571, %v522
      %v573 = vadd.f32 %v572, %v523
      %v574 = vadd.f32 %v573, %v524
      %v575 = vadd.f32 %v574, %v525
      %v576 = vadd.f32 %v575, %v526
      %v577 = vadd.f32 %v576, %v527
      %v578 = vadd.f32 %v577, %v528
      %v579 = vadd.f32 %v578, %v529
      %v580 = vadd.f32 %v579, %v530
      %v581 = vadd.f32 %v580, %v531
      %v582 = vadd.f32 %v480, %v581
      %583 = vst [vmem:[#allocation7] sm:$0xff] %v582
    $region29: #{tpu_custom_call.1} parent=1 // pred_fallthru
      _
    // Predicated region
    $region30: #{tpu_custom_call.1} parent=1 // pred_check
      _
    $region31: #{tpu_custom_call.1} parent=1 // pred_check_branch
      %585 = sbr.rel (0) target = $region33
    $region32: #{tpu_custom_call.1} parent=1 // pred_region
      %s587 = ssub.s32 128, 128
      %588 = vsyncadd [#allocation4], %s587
      %s590 = sshll.u32 [#allocation7], 4
      %s591 = int_to_ptr.vmem [resolvable:$true] %s590
      %593 = dma.vmem_to_hbm [thread:$0]  %s591, 128, %s2, [#allocation4]
    $region33: #{tpu_custom_call.1} parent=1 // pred_fallthru
      _
    // Predicated region
    $region34: #{tpu_custom_call.1} parent=1 // pred_check
      _
    $region35: #{tpu_custom_call.1} parent=1 // pred_check_branch
      %595 = sbr.rel (0) target = $region37
    $region36: #{tpu_custom_call.1} parent=1 // pred_region
      %596 = dma.done [#allocation4], 128
    $region37: #{tpu_custom_call.1} parent=1 // pred_fallthru
      _
    %597 = vsyncpa [#allocation3], 1
    %598 = vsyncpa [#allocation6], 1
    %599 = vsyncpa [#allocation4], 1

</llo_original>
